<compile_context>
chip_gen: v7x
topology: tpu7x:2x2x1
jax: 0.10.0
libtpu: 0.0.40
codegen_flags: <defaults>
</compile_context>

<pallas_src>
import jax
import jax.numpy as jnp
from jax import lax
from jax.experimental import pallas as pl
from jax.experimental.pallas import tpu as pltpu

LANE = 128   # lane width
SUB = 8      # sublanes per vreg


def mlp_kernel(x_ref, w1_ref, b1_ref, w2_ref, b2_ref, w3_ref, b3_ref, o_ref):
    """Fused 2->5->10->1 MLP on dense (8,128) batch planes.

    x_ref:  (2, R, 128) VMEM  -- two input-feature planes, batch on (sublane, lane)
    wK/bK:  1-D f32 SMEM      -- flattened PyTorch-layout weights / biases
    o_ref:  (R, 128) VMEM     -- single dense output plane
    """
    rows = x_ref.shape[1]
    n_chunks = rows // SUB

    # Hoist all scalar (SMEM) reads out of the loop; they ride the idle scalar slots.
    w1 = [w1_ref[i] for i in range(10)]   # w1[2*j + k] == W1[j, k]
    b1 = [b1_ref[i] for i in range(5)]
    w2 = [w2_ref[i] for i in range(50)]   # w2[5*j + k] == W2[j, k]
    b2 = [b2_ref[i] for i in range(10)]
    w3 = [w3_ref[i] for i in range(10)]   # w3[k]       == W3[0, k]
    b3 = b3_ref[0]

    def chunk(c, carry):
        r = pl.multiple_of(c * SUB, SUB)
        x0 = x_ref[0, pl.ds(r, SUB), :]          # (8, 128) -- one vreg
        x1 = x_ref[1, pl.ds(r, SUB), :]

        # layer 1: 2 -> 5, ReLU   (scalar-weight VPU mul-adds, no XLU, no MXU)
        h1 = [jnp.maximum(b1[j] + w1[2 * j] * x0 + w1[2 * j + 1] * x1, 0.0)
              for j in range(5)]

        # layer 2: 5 -> 10, ReLU
        h2 = []
        for j in range(10):
            acc = b2[j]
            for k in range(5):
                acc = acc + w2[5 * j + k] * h1[k]
            h2.append(jnp.maximum(acc, 0.0))

        # layer 3: 10 -> 1
        out = b3
        for k in range(10):
            out = out + w3[k] * h2[k]

        o_ref[pl.ds(r, SUB), :] = out.astype(o_ref.dtype)   # full-vreg store
        return carry

    lax.fori_loop(0, n_chunks, chunk, 0, unroll=True)


def circle_model_v0(x, params, tile_n=32768):
    """x: (N, 2) float32 -> (N, 1) float32, same math as the PyTorch module."""
    w1, b1 = params["w1"], params["b1"]
    w2, b2 = params["w2"], params["b2"]
    w3, b3 = params["w3"], params["b3"]

    n = x.shape[0]

    # Work in units of 128-lane rows, rounded to full (8,128) vregs.
    rows = int(pl.cdiv(max(n, 1), LANE))
    rows = SUB * int(pl.cdiv(rows, SUB))

    tile_rows = min(max(tile_n // LANE, SUB), rows)
    tile_rows = max(SUB, SUB * (tile_rows // SUB))

    # v7x megacore: keep >= 2 grid steps when there is enough work so the
    # ("parallel",) grid axis can shard across both TensorCores.
    if rows >= 2 * SUB and tile_rows >= rows:
        tile_rows = SUB * int(pl.cdiv(rows, 2 * SUB))

    rows_pad = tile_rows * int(pl.cdiv(rows, tile_rows))
    n_pad = rows_pad * LANE

    # Feature-major, lane-dense planes: (2, rows_pad, 128), batch on (sublane, lane).
    # Keeping the dataset feature-major (2, N) upstream would avoid this extra pass.
    x_t = jnp.pad(x.T.astype(jnp.float32), ((0, 0), (0, n_pad - n)))
    x_t = x_t.reshape(2, rows_pad, LANE)

    flat = lambda a: a.reshape(-1).astype(jnp.float32)
    smem = pl.BlockSpec(memory_space=pltpu.MemorySpace.SMEM)

    grid = (rows_pad // tile_rows,)
    out = pl.pallas_call(
        mlp_kernel,
        grid=grid,
        out_shape=jax.ShapeDtypeStruct((rows_pad, LANE), jnp.float32),
        in_specs=[pl.BlockSpec((2, tile_rows, LANE), lambda i: (0, i, 0)),
                  smem, smem, smem, smem, smem, smem],
        out_specs=pl.BlockSpec((tile_rows, LANE), lambda i: (i, 0)),
        compiler_params=pltpu.CompilerParams(
            dimension_semantics=("parallel",)),
    )(x_t, flat(w1), flat(b1), flat(w2), flat(b2), flat(w3), flat(b3))

    # Dense (rows_pad, 128) plane -> (N, 1), matching the PyTorch output shape.
    return out.reshape(n_pad)[:n].reshape(n, 1)


def init_params(key):
    """Deterministic init mirroring PyTorch's default Linear init
    (uniform(-1/sqrt(fan_in), 1/sqrt(fan_in)) for both weight and bias).
    Stored in PyTorch layout: W (out, in), b (out,)."""
    dims = [(2, 5), (5, 10), (10, 1)]
    params = {}
    keys = jax.random.split(key, 2 * len(dims))
    for i, (fin, fout) in enumerate(dims):
        bound = 1.0 / (fin ** 0.5)
        params[f"w{i + 1}"] = jax.random.uniform(
            keys[2 * i], (fout, fin), jnp.float32, minval=-bound, maxval=bound)
        params[f"b{i + 1}"] = jax.random.uniform(
            keys[2 * i + 1], (fout,), jnp.float32, minval=-bound, maxval=bound)
    return params


def reference(x, params):
    h1 = jnp.maximum(x @ params["w1"].T + params["b1"], 0.0)
    h2 = jnp.maximum(h1 @ params["w2"].T + params["b2"], 0.0)
    return h2 @ params["w3"].T + params["b3"]


if __name__ == "__main__":
    key = jax.random.PRNGKey(0)
    pkey, k1, k2, k3 = jax.random.split(key, 4)
    params = init_params(pkey)

    # Small batch of 2-D points, like the circle-classification toy dataset.
    x = jax.random.normal(k1, (8, 2), jnp.float32)
    out = jax.block_until_ready(circle_model_v0(x, params))
    assert out.shape == (8, 1), out.shape
    assert jnp.allclose(out, reference(x, params), atol=1e-5, rtol=1e-5), "mismatch (small)"

    # Default tile: exercises the >=2-grid-step split (v7x megacore path).
    x2 = jax.random.normal(k2, (2048, 2), jnp.float32)
    out2 = jax.block_until_ready(circle_model_v0(x2, params))
    assert out2.shape == (2048, 1), out2.shape
    assert jnp.allclose(out2, reference(x2, params), atol=1e-5, rtol=1e-5), "mismatch (split)"

    # Multi-step grid with a ragged, zero-padded tail tile.
    x3 = jax.random.normal(k3, (5000, 2), jnp.float32)
    out3 = jax.block_until_ready(circle_model_v0(x3, params, tile_n=1024))
    assert out3.shape == (5000, 1), out3.shape
    assert jnp.allclose(out3, reference(x3, params), atol=1e-5, rtol=1e-5), "mismatch (gridded)"

    print("KERNEL_OK")
</pallas_src>

<mosaic_0001>
module attributes {stable_mosaic.version = 11 : i64} {
  func.func @mlp_kernel(%arg0: i32, %arg1: memref<2x8x128xf32, #tpu.memory_space<vmem>>, %arg2: memref<10xf32, #tpu.memory_space<smem>>, %arg3: memref<5xf32, #tpu.memory_space<smem>>, %arg4: memref<50xf32, #tpu.memory_space<smem>>, %arg5: memref<10xf32, #tpu.memory_space<smem>>, %arg6: memref<10xf32, #tpu.memory_space<smem>>, %arg7: memref<1xf32, #tpu.memory_space<smem>>, %arg8: memref<8x128xf32, #tpu.memory_space<vmem>>) attributes {dimension_semantics = [#tpu.dimension_semantics<parallel>], iteration_bounds = array<i64: 1>, scalar_prefetch = 0 : i64, scratch_operands = 0 : i64, tpu.core_type = #tpu.core_type<tc>, window_params = [{transform_indices = @transform_0, window_bounds = array<i64: 2, 8, 128>}, {transform_indices = @transform_1, window_bounds = array<i64: 10>}, {transform_indices = @transform_2, window_bounds = array<i64: 5>}, {transform_indices = @transform_3, window_bounds = array<i64: 50>}, {transform_indices = @transform_4, window_bounds = array<i64: 10>}, {transform_indices = @transform_5, window_bounds = array<i64: 10>}, {transform_indices = @transform_6, window_bounds = array<i64: 1>}, {transform_indices = @transform_7, window_bounds = array<i64: 8, 128>}]} {
    %c0 = arith.constant 0 : index
    %0 = memref.load %arg2[%c0] : memref<10xf32, #tpu.memory_space<smem>>
    %c1 = arith.constant 1 : index
    %1 = memref.load %arg2[%c1] : memref<10xf32, #tpu.memory_space<smem>>
    %c2 = arith.constant 2 : index
    %2 = memref.load %arg2[%c2] : memref<10xf32, #tpu.memory_space<smem>>
    %c3 = arith.constant 3 : index
    %3 = memref.load %arg2[%c3] : memref<10xf32, #tpu.memory_space<smem>>
    %c4 = arith.constant 4 : index
    %4 = memref.load %arg2[%c4] : memref<10xf32, #tpu.memory_space<smem>>
    %c5 = arith.constant 5 : index
    %5 = memref.load %arg2[%c5] : memref<10xf32, #tpu.memory_space<smem>>
    %c6 = arith.constant 6 : index
    %6 = memref.load %arg2[%c6] : memref<10xf32, #tpu.memory_space<smem>>
    %c7 = arith.constant 7 : index
    %7 = memref.load %arg2[%c7] : memref<10xf32, #tpu.memory_space<smem>>
    %c8 = arith.constant 8 : index
    %8 = memref.load %arg2[%c8] : memref<10xf32, #tpu.memory_space<smem>>
    %c9 = arith.constant 9 : index
    %9 = memref.load %arg2[%c9] : memref<10xf32, #tpu.memory_space<smem>>
    %c0_0 = arith.constant 0 : index
    %10 = memref.load %arg3[%c0_0] : memref<5xf32, #tpu.memory_space<smem>>
    %c1_1 = arith.constant 1 : index
    %11 = memref.load %arg3[%c1_1] : memref<5xf32, #tpu.memory_space<smem>>
    %c2_2 = arith.constant 2 : index
    %12 = memref.load %arg3[%c2_2] : memref<5xf32, #tpu.memory_space<smem>>
    %c3_3 = arith.constant 3 : index
    %13 = memref.load %arg3[%c3_3] : memref<5xf32, #tpu.memory_space<smem>>
    %c4_4 = arith.constant 4 : index
    %14 = memref.load %arg3[%c4_4] : memref<5xf32, #tpu.memory_space<smem>>
    %c0_5 = arith.constant 0 : index
    %15 = memref.load %arg4[%c0_5] : memref<50xf32, #tpu.memory_space<smem>>
    %c1_6 = arith.constant 1 : index
    %16 = memref.load %arg4[%c1_6] : memref<50xf32, #tpu.memory_space<smem>>
    %c2_7 = arith.constant 2 : index
    %17 = memref.load %arg4[%c2_7] : memref<50xf32, #tpu.memory_space<smem>>
    %c3_8 = arith.constant 3 : index
    %18 = memref.load %arg4[%c3_8] : memref<50xf32, #tpu.memory_space<smem>>
    %c4_9 = arith.constant 4 : index
    %19 = memref.load %arg4[%c4_9] : memref<50xf32, #tpu.memory_space<smem>>
    %c5_10 = arith.constant 5 : index
    %20 = memref.load %arg4[%c5_10] : memref<50xf32, #tpu.memory_space<smem>>
    %c6_11 = arith.constant 6 : index
    %21 = memref.load %arg4[%c6_11] : memref<50xf32, #tpu.memory_space<smem>>
    %c7_12 = arith.constant 7 : index
    %22 = memref.load %arg4[%c7_12] : memref<50xf32, #tpu.memory_space<smem>>
    %c8_13 = arith.constant 8 : index
    %23 = memref.load %arg4[%c8_13] : memref<50xf32, #tpu.memory_space<smem>>
    %c9_14 = arith.constant 9 : index
    %24 = memref.load %arg4[%c9_14] : memref<50xf32, #tpu.memory_space<smem>>
    %c10 = arith.constant 10 : index
    %25 = memref.load %arg4[%c10] : memref<50xf32, #tpu.memory_space<smem>>
    %c11 = arith.constant 11 : index
    %26 = memref.load %arg4[%c11] : memref<50xf32, #tpu.memory_space<smem>>
    %c12 = arith.constant 12 : index
    %27 = memref.load %arg4[%c12] : memref<50xf32, #tpu.memory_space<smem>>
    %c13 = arith.constant 13 : index
    %28 = memref.load %arg4[%c13] : memref<50xf32, #tpu.memory_space<smem>>
    %c14 = arith.constant 14 : index
    %29 = memref.load %arg4[%c14] : memref<50xf32, #tpu.memory_space<smem>>
    %c15 = arith.constant 15 : index
    %30 = memref.load %arg4[%c15] : memref<50xf32, #tpu.memory_space<smem>>
    %c16 = arith.constant 16 : index
    %31 = memref.load %arg4[%c16] : memref<50xf32, #tpu.memory_space<smem>>
    %c17 = arith.constant 17 : index
    %32 = memref.load %arg4[%c17] : memref<50xf32, #tpu.memory_space<smem>>
    %c18 = arith.constant 18 : index
    %33 = memref.load %arg4[%c18] : memref<50xf32, #tpu.memory_space<smem>>
    %c19 = arith.constant 19 : index
    %34 = memref.load %arg4[%c19] : memref<50xf32, #tpu.memory_space<smem>>
    %c20 = arith.constant 20 : index
    %35 = memref.load %arg4[%c20] : memref<50xf32, #tpu.memory_space<smem>>
    %c21 = arith.constant 21 : index
    %36 = memref.load %arg4[%c21] : memref<50xf32, #tpu.memory_space<smem>>
    %c22 = arith.constant 22 : index
    %37 = memref.load %arg4[%c22] : memref<50xf32, #tpu.memory_space<smem>>
    %c23 = arith.constant 23 : index
    %38 = memref.load %arg4[%c23] : memref<50xf32, #tpu.memory_space<smem>>
    %c24 = arith.constant 24 : index
    %39 = memref.load %arg4[%c24] : memref<50xf32, #tpu.memory_space<smem>>
    %c25 = arith.constant 25 : index
    %40 = memref.load %arg4[%c25] : memref<50xf32, #tpu.memory_space<smem>>
    %c26 = arith.constant 26 : index
    %41 = memref.load %arg4[%c26] : memref<50xf32, #tpu.memory_space<smem>>
    %c27 = arith.constant 27 : index
    %42 = memref.load %arg4[%c27] : memref<50xf32, #tpu.memory_space<smem>>
    %c28 = arith.constant 28 : index
    %43 = memref.load %arg4[%c28] : memref<50xf32, #tpu.memory_space<smem>>
    %c29 = arith.constant 29 : index
    %44 = memref.load %arg4[%c29] : memref<50xf32, #tpu.memory_space<smem>>
    %c30 = arith.constant 30 : index
    %45 = memref.load %arg4[%c30] : memref<50xf32, #tpu.memory_space<smem>>
    %c31 = arith.constant 31 : index
    %46 = memref.load %arg4[%c31] : memref<50xf32, #tpu.memory_space<smem>>
    %c32 = arith.constant 32 : index
    %47 = memref.load %arg4[%c32] : memref<50xf32, #tpu.memory_space<smem>>
    %c33 = arith.constant 33 : index
    %48 = memref.load %arg4[%c33] : memref<50xf32, #tpu.memory_space<smem>>
    %c34 = arith.constant 34 : index
    %49 = memref.load %arg4[%c34] : memref<50xf32, #tpu.memory_space<smem>>
    %c35 = arith.constant 35 : index
    %50 = memref.load %arg4[%c35] : memref<50xf32, #tpu.memory_space<smem>>
    %c36 = arith.constant 36 : index
    %51 = memref.load %arg4[%c36] : memref<50xf32, #tpu.memory_space<smem>>
    %c37 = arith.constant 37 : index
    %52 = memref.load %arg4[%c37] : memref<50xf32, #tpu.memory_space<smem>>
    %c38 = arith.constant 38 : index
    %53 = memref.load %arg4[%c38] : memref<50xf32, #tpu.memory_space<smem>>
    %c39 = arith.constant 39 : index
    %54 = memref.load %arg4[%c39] : memref<50xf32, #tpu.memory_space<smem>>
    %c40 = arith.constant 40 : index
    %55 = memref.load %arg4[%c40] : memref<50xf32, #tpu.memory_space<smem>>
    %c41 = arith.constant 41 : index
    %56 = memref.load %arg4[%c41] : memref<50xf32, #tpu.memory_space<smem>>
    %c42 = arith.constant 42 : index
    %57 = memref.load %arg4[%c42] : memref<50xf32, #tpu.memory_space<smem>>
    %c43 = arith.constant 43 : index
    %58 = memref.load %arg4[%c43] : memref<50xf32, #tpu.memory_space<smem>>
    %c44 = arith.constant 44 : index
    %59 = memref.load %arg4[%c44] : memref<50xf32, #tpu.memory_space<smem>>
    %c45 = arith.constant 45 : index
    %60 = memref.load %arg4[%c45] : memref<50xf32, #tpu.memory_space<smem>>
    %c46 = arith.constant 46 : index
    %61 = memref.load %arg4[%c46] : memref<50xf32, #tpu.memory_space<smem>>
    %c47 = arith.constant 47 : index
    %62 = memref.load %arg4[%c47] : memref<50xf32, #tpu.memory_space<smem>>
    %c48 = arith.constant 48 : index
    %63 = memref.load %arg4[%c48] : memref<50xf32, #tpu.memory_space<smem>>
    %c49 = arith.constant 49 : index
    %64 = memref.load %arg4[%c49] : memref<50xf32, #tpu.memory_space<smem>>
    %c0_15 = arith.constant 0 : index
    %65 = memref.load %arg5[%c0_15] : memref<10xf32, #tpu.memory_space<smem>>
    %c1_16 = arith.constant 1 : index
    %66 = memref.load %arg5[%c1_16] : memref<10xf32, #tpu.memory_space<smem>>
    %c2_17 = arith.constant 2 : index
    %67 = memref.load %arg5[%c2_17] : memref<10xf32, #tpu.memory_space<smem>>
    %c3_18 = arith.constant 3 : index
    %68 = memref.load %arg5[%c3_18] : memref<10xf32, #tpu.memory_space<smem>>
    %c4_19 = arith.constant 4 : index
    %69 = memref.load %arg5[%c4_19] : memref<10xf32, #tpu.memory_space<smem>>
    %c5_20 = arith.constant 5 : index
    %70 = memref.load %arg5[%c5_20] : memref<10xf32, #tpu.memory_space<smem>>
    %c6_21 = arith.constant 6 : index
    %71 = memref.load %arg5[%c6_21] : memref<10xf32, #tpu.memory_space<smem>>
    %c7_22 = arith.constant 7 : index
    %72 = memref.load %arg5[%c7_22] : memref<10xf32, #tpu.memory_space<smem>>
    %c8_23 = arith.constant 8 : index
    %73 = memref.load %arg5[%c8_23] : memref<10xf32, #tpu.memory_space<smem>>
    %c9_24 = arith.constant 9 : index
    %74 = memref.load %arg5[%c9_24] : memref<10xf32, #tpu.memory_space<smem>>
    %c0_25 = arith.constant 0 : index
    %75 = memref.load %arg6[%c0_25] : memref<10xf32, #tpu.memory_space<smem>>
    %c1_26 = arith.constant 1 : index
    %76 = memref.load %arg6[%c1_26] : memref<10xf32, #tpu.memory_space<smem>>
    %c2_27 = arith.constant 2 : index
    %77 = memref.load %arg6[%c2_27] : memref<10xf32, #tpu.memory_space<smem>>
    %c3_28 = arith.constant 3 : index
    %78 = memref.load %arg6[%c3_28] : memref<10xf32, #tpu.memory_space<smem>>
    %c4_29 = arith.constant 4 : index
    %79 = memref.load %arg6[%c4_29] : memref<10xf32, #tpu.memory_space<smem>>
    %c5_30 = arith.constant 5 : index
    %80 = memref.load %arg6[%c5_30] : memref<10xf32, #tpu.memory_space<smem>>
    %c6_31 = arith.constant 6 : index
    %81 = memref.load %arg6[%c6_31] : memref<10xf32, #tpu.memory_space<smem>>
    %c7_32 = arith.constant 7 : index
    %82 = memref.load %arg6[%c7_32] : memref<10xf32, #tpu.memory_space<smem>>
    %c8_33 = arith.constant 8 : index
    %83 = memref.load %arg6[%c8_33] : memref<10xf32, #tpu.memory_space<smem>>
    %c9_34 = arith.constant 9 : index
    %84 = memref.load %arg6[%c9_34] : memref<10xf32, #tpu.memory_space<smem>>
    %c0_35 = arith.constant 0 : index
    %85 = memref.load %arg7[%c0_35] : memref<1xf32, #tpu.memory_space<smem>>
    %c0_i32 = arith.constant 0 : i32
    %c8_i32 = arith.constant 8 : i32
    %86 = arith.muli %c0_i32, %c8_i32 : i32
    %87 = tpu.assume_multiple %86, 8 : i32
    %c0_36 = arith.constant 0 : index
    %88 = arith.index_cast %87 : i32 to index
    %c0_37 = arith.constant 0 : index
    %89 = vector.load %arg1[%c0_36, %88, %c0_37] : memref<2x8x128xf32, #tpu.memory_space<vmem>>, vector<1x8x128xf32>
    %90 = vector.shape_cast %89 : vector<1x8x128xf32> to vector<8x128xf32>
    %c1_38 = arith.constant 1 : index
    %91 = arith.index_cast %87 : i32 to index
    %c0_39 = arith.constant 0 : index
    %92 = vector.load %arg1[%c1_38, %91, %c0_39] : memref<2x8x128xf32, #tpu.memory_space<vmem>>, vector<1x8x128xf32>
    %93 = vector.shape_cast %92 : vector<1x8x128xf32> to vector<8x128xf32>
    %94 = vector.broadcast %0 : f32 to vector<8x128xf32>
    %95 = arith.mulf %94, %90 : vector<8x128xf32>
    %96 = vector.broadcast %10 : f32 to vector<8x128xf32>
    %97 = arith.addf %96, %95 : vector<8x128xf32>
    %98 = vector.broadcast %1 : f32 to vector<8x128xf32>
    %99 = arith.mulf %98, %93 : vector<8x128xf32>
    %100 = arith.addf %97, %99 : vector<8x128xf32>
    %cst = arith.constant 0.000000e+00 : f32
    %101 = vector.broadcast %cst : f32 to vector<8x128xf32>
    %102 = arith.maximumf %100, %101 : vector<8x128xf32>
    %103 = vector.broadcast %2 : f32 to vector<8x128xf32>
    %104 = arith.mulf %103, %90 : vector<8x128xf32>
    %105 = vector.broadcast %11 : f32 to vector<8x128xf32>
    %106 = arith.addf %105, %104 : vector<8x128xf32>
    %107 = vector.broadcast %3 : f32 to vector<8x128xf32>
    %108 = arith.mulf %107, %93 : vector<8x128xf32>
    %109 = arith.addf %106, %108 : vector<8x128xf32>
    %cst_40 = arith.constant 0.000000e+00 : f32
    %110 = vector.broadcast %cst_40 : f32 to vector<8x128xf32>
    %111 = arith.maximumf %109, %110 : vector<8x128xf32>
    %112 = vector.broadcast %4 : f32 to vector<8x128xf32>
    %113 = arith.mulf %112, %90 : vector<8x128xf32>
    %114 = vector.broadcast %12 : f32 to vector<8x128xf32>
    %115 = arith.addf %114, %113 : vector<8x128xf32>
    %116 = vector.broadcast %5 : f32 to vector<8x128xf32>
    %117 = arith.mulf %116, %93 : vector<8x128xf32>
    %118 = arith.addf %115, %117 : vector<8x128xf32>
    %cst_41 = arith.constant 0.000000e+00 : f32
    %119 = vector.broadcast %cst_41 : f32 to vector<8x128xf32>
    %120 = arith.maximumf %118, %119 : vector<8x128xf32>
    %121 = vector.broadcast %6 : f32 to vector<8x128xf32>
    %122 = arith.mulf %121, %90 : vector<8x128xf32>
    %123 = vector.broadcast %13 : f32 to vector<8x128xf32>
    %124 = arith.addf %123, %122 : vector<8x128xf32>
    %125 = vector.broadcast %7 : f32 to vector<8x128xf32>
    %126 = arith.mulf %125, %93 : vector<8x128xf32>
    %127 = arith.addf %124, %126 : vector<8x128xf32>
    %cst_42 = arith.constant 0.000000e+00 : f32
    %128 = vector.broadcast %cst_42 : f32 to vector<8x128xf32>
    %129 = arith.maximumf %127, %128 : vector<8x128xf32>
    %130 = vector.broadcast %8 : f32 to vector<8x128xf32>
    %131 = arith.mulf %130, %90 : vector<8x128xf32>
    %132 = vector.broadcast %14 : f32 to vector<8x128xf32>
    %133 = arith.addf %132, %131 : vector<8x128xf32>
    %134 = vector.broadcast %9 : f32 to vector<8x128xf32>
    %135 = arith.mulf %134, %93 : vector<8x128xf32>
    %136 = arith.addf %133, %135 : vector<8x128xf32>
    %cst_43 = arith.constant 0.000000e+00 : f32
    %137 = vector.broadcast %cst_43 : f32 to vector<8x128xf32>
    %138 = arith.maximumf %136, %137 : vector<8x128xf32>
    %139 = vector.broadcast %15 : f32 to vector<8x128xf32>
    %140 = arith.mulf %139, %102 : vector<8x128xf32>
    %141 = vector.broadcast %65 : f32 to vector<8x128xf32>
    %142 = arith.addf %141, %140 : vector<8x128xf32>
    %143 = vector.broadcast %16 : f32 to vector<8x128xf32>
    %144 = arith.mulf %143, %111 : vector<8x128xf32>
    %145 = arith.addf %142, %144 : vector<8x128xf32>
    %146 = vector.broadcast %17 : f32 to vector<8x128xf32>
    %147 = arith.mulf %146, %120 : vector<8x128xf32>
    %148 = arith.addf %145, %147 : vector<8x128xf32>
    %149 = vector.broadcast %18 : f32 to vector<8x128xf32>
    %150 = arith.mulf %149, %129 : vector<8x128xf32>
    %151 = arith.addf %148, %150 : vector<8x128xf32>
    %152 = vector.broadcast %19 : f32 to vector<8x128xf32>
    %153 = arith.mulf %152, %138 : vector<8x128xf32>
    %154 = arith.addf %151, %153 : vector<8x128xf32>
    %cst_44 = arith.constant 0.000000e+00 : f32
    %155 = vector.broadcast %cst_44 : f32 to vector<8x128xf32>
    %156 = arith.maximumf %154, %155 : vector<8x128xf32>
    %157 = vector.broadcast %20 : f32 to vector<8x128xf32>
    %158 = arith.mulf %157, %102 : vector<8x128xf32>
    %159 = vector.broadcast %66 : f32 to vector<8x128xf32>
    %160 = arith.addf %159, %158 : vector<8x128xf32>
    %161 = vector.broadcast %21 : f32 to vector<8x128xf32>
    %162 = arith.mulf %161, %111 : vector<8x128xf32>
    %163 = arith.addf %160, %162 : vector<8x128xf32>
    %164 = vector.broadcast %22 : f32 to vector<8x128xf32>
    %165 = arith.mulf %164, %120 : vector<8x128xf32>
    %166 = arith.addf %163, %165 : vector<8x128xf32>
    %167 = vector.broadcast %23 : f32 to vector<8x128xf32>
    %168 = arith.mulf %167, %129 : vector<8x128xf32>
    %169 = arith.addf %166, %168 : vector<8x128xf32>
    %170 = vector.broadcast %24 : f32 to vector<8x128xf32>
    %171 = arith.mulf %170, %138 : vector<8x128xf32>
    %172 = arith.addf %169, %171 : vector<8x128xf32>
    %cst_45 = arith.constant 0.000000e+00 : f32
    %173 = vector.broadcast %cst_45 : f32 to vector<8x128xf32>
    %174 = arith.maximumf %172, %173 : vector<8x128xf32>
    %175 = vector.broadcast %25 : f32 to vector<8x128xf32>
    %176 = arith.mulf %175, %102 : vector<8x128xf32>
    %177 = vector.broadcast %67 : f32 to vector<8x128xf32>
    %178 = arith.addf %177, %176 : vector<8x128xf32>
    %179 = vector.broadcast %26 : f32 to vector<8x128xf32>
    %180 = arith.mulf %179, %111 : vector<8x128xf32>
    %181 = arith.addf %178, %180 : vector<8x128xf32>
    %182 = vector.broadcast %27 : f32 to vector<8x128xf32>
    %183 = arith.mulf %182, %120 : vector<8x128xf32>
    %184 = arith.addf %181, %183 : vector<8x128xf32>
    %185 = vector.broadcast %28 : f32 to vector<8x128xf32>
    %186 = arith.mulf %185, %129 : vector<8x128xf32>
    %187 = arith.addf %184, %186 : vector<8x128xf32>
    %188 = vector.broadcast %29 : f32 to vector<8x128xf32>
    %189 = arith.mulf %188, %138 : vector<8x128xf32>
    %190 = arith.addf %187, %189 : vector<8x128xf32>
    %cst_46 = arith.constant 0.000000e+00 : f32
    %191 = vector.broadcast %cst_46 : f32 to vector<8x128xf32>
    %192 = arith.maximumf %190, %191 : vector<8x128xf32>
    %193 = vector.broadcast %30 : f32 to vector<8x128xf32>
    %194 = arith.mulf %193, %102 : vector<8x128xf32>
    %195 = vector.broadcast %68 : f32 to vector<8x128xf32>
    %196 = arith.addf %195, %194 : vector<8x128xf32>
    %197 = vector.broadcast %31 : f32 to vector<8x128xf32>
    %198 = arith.mulf %197, %111 : vector<8x128xf32>
    %199 = arith.addf %196, %198 : vector<8x128xf32>
    %200 = vector.broadcast %32 : f32 to vector<8x128xf32>
    %201 = arith.mulf %200, %120 : vector<8x128xf32>
    %202 = arith.addf %199, %201 : vector<8x128xf32>
    %203 = vector.broadcast %33 : f32 to vector<8x128xf32>
    %204 = arith.mulf %203, %129 : vector<8x128xf32>
    %205 = arith.addf %202, %204 : vector<8x128xf32>
    %206 = vector.broadcast %34 : f32 to vector<8x128xf32>
    %207 = arith.mulf %206, %138 : vector<8x128xf32>
    %208 = arith.addf %205, %207 : vector<8x128xf32>
    %cst_47 = arith.constant 0.000000e+00 : f32
    %209 = vector.broadcast %cst_47 : f32 to vector<8x128xf32>
    %210 = arith.maximumf %208, %209 : vector<8x128xf32>
    %211 = vector.broadcast %35 : f32 to vector<8x128xf32>
    %212 = arith.mulf %211, %102 : vector<8x128xf32>
    %213 = vector.broadcast %69 : f32 to vector<8x128xf32>
    %214 = arith.addf %213, %212 : vector<8x128xf32>
    %215 = vector.broadcast %36 : f32 to vector<8x128xf32>
    %216 = arith.mulf %215, %111 : vector<8x128xf32>
    %217 = arith.addf %214, %216 : vector<8x128xf32>
    %218 = vector.broadcast %37 : f32 to vector<8x128xf32>
    %219 = arith.mulf %218, %120 : vector<8x128xf32>
    %220 = arith.addf %217, %219 : vector<8x128xf32>
    %221 = vector.broadcast %38 : f32 to vector<8x128xf32>
    %222 = arith.mulf %221, %129 : vector<8x128xf32>
    %223 = arith.addf %220, %222 : vector<8x128xf32>
    %224 = vector.broadcast %39 : f32 to vector<8x128xf32>
    %225 = arith.mulf %224, %138 : vector<8x128xf32>
    %226 = arith.addf %223, %225 : vector<8x128xf32>
    %cst_48 = arith.constant 0.000000e+00 : f32
    %227 = vector.broadcast %cst_48 : f32 to vector<8x128xf32>
    %228 = arith.maximumf %226, %227 : vector<8x128xf32>
    %229 = vector.broadcast %40 : f32 to vector<8x128xf32>
    %230 = arith.mulf %229, %102 : vector<8x128xf32>
    %231 = vector.broadcast %70 : f32 to vector<8x128xf32>
    %232 = arith.addf %231, %230 : vector<8x128xf32>
    %233 = vector.broadcast %41 : f32 to vector<8x128xf32>
    %234 = arith.mulf %233, %111 : vector<8x128xf32>
    %235 = arith.addf %232, %234 : vector<8x128xf32>
    %236 = vector.broadcast %42 : f32 to vector<8x128xf32>
    %237 = arith.mulf %236, %120 : vector<8x128xf32>
    %238 = arith.addf %235, %237 : vector<8x128xf32>
    %239 = vector.broadcast %43 : f32 to vector<8x128xf32>
    %240 = arith.mulf %239, %129 : vector<8x128xf32>
    %241 = arith.addf %238, %240 : vector<8x128xf32>
    %242 = vector.broadcast %44 : f32 to vector<8x128xf32>
    %243 = arith.mulf %242, %138 : vector<8x128xf32>
    %244 = arith.addf %241, %243 : vector<8x128xf32>
    %cst_49 = arith.constant 0.000000e+00 : f32
    %245 = vector.broadcast %cst_49 : f32 to vector<8x128xf32>
    %246 = arith.maximumf %244, %245 : vector<8x128xf32>
    %247 = vector.broadcast %45 : f32 to vector<8x128xf32>
    %248 = arith.mulf %247, %102 : vector<8x128xf32>
    %249 = vector.broadcast %71 : f32 to vector<8x128xf32>
    %250 = arith.addf %249, %248 : vector<8x128xf32>
    %251 = vector.broadcast %46 : f32 to vector<8x128xf32>
    %252 = arith.mulf %251, %111 : vector<8x128xf32>
    %253 = arith.addf %250, %252 : vector<8x128xf32>
    %254 = vector.broadcast %47 : f32 to vector<8x128xf32>
    %255 = arith.mulf %254, %120 : vector<8x128xf32>
    %256 = arith.addf %253, %255 : vector<8x128xf32>
    %257 = vector.broadcast %48 : f32 to vector<8x128xf32>
    %258 = arith.mulf %257, %129 : vector<8x128xf32>
    %259 = arith.addf %256, %258 : vector<8x128xf32>
    %260 = vector.broadcast %49 : f32 to vector<8x128xf32>
    %261 = arith.mulf %260, %138 : vector<8x128xf32>
    %262 = arith.addf %259, %261 : vector<8x128xf32>
    %cst_50 = arith.constant 0.000000e+00 : f32
    %263 = vector.broadcast %cst_50 : f32 to vector<8x128xf32>
    %264 = arith.maximumf %262, %263 : vector<8x128xf32>
    %265 = vector.broadcast %50 : f32 to vector<8x128xf32>
    %266 = arith.mulf %265, %102 : vector<8x128xf32>
    %267 = vector.broadcast %72 : f32 to vector<8x128xf32>
    %268 = arith.addf %267, %266 : vector<8x128xf32>
    %269 = vector.broadcast %51 : f32 to vector<8x128xf32>
    %270 = arith.mulf %269, %111 : vector<8x128xf32>
    %271 = arith.addf %268, %270 : vector<8x128xf32>
    %272 = vector.broadcast %52 : f32 to vector<8x128xf32>
    %273 = arith.mulf %272, %120 : vector<8x128xf32>
    %274 = arith.addf %271, %273 : vector<8x128xf32>
    %275 = vector.broadcast %53 : f32 to vector<8x128xf32>
    %276 = arith.mulf %275, %129 : vector<8x128xf32>
    %277 = arith.addf %274, %276 : vector<8x128xf32>
    %278 = vector.broadcast %54 : f32 to vector<8x128xf32>
    %279 = arith.mulf %278, %138 : vector<8x128xf32>
    %280 = arith.addf %277, %279 : vector<8x128xf32>
    %cst_51 = arith.constant 0.000000e+00 : f32
    %281 = vector.broadcast %cst_51 : f32 to vector<8x128xf32>
    %282 = arith.maximumf %280, %281 : vector<8x128xf32>
    %283 = vector.broadcast %55 : f32 to vector<8x128xf32>
    %284 = arith.mulf %283, %102 : vector<8x128xf32>
    %285 = vector.broadcast %73 : f32 to vector<8x128xf32>
    %286 = arith.addf %285, %284 : vector<8x128xf32>
    %287 = vector.broadcast %56 : f32 to vector<8x128xf32>
    %288 = arith.mulf %287, %111 : vector<8x128xf32>
    %289 = arith.addf %286, %288 : vector<8x128xf32>
    %290 = vector.broadcast %57 : f32 to vector<8x128xf32>
    %291 = arith.mulf %290, %120 : vector<8x128xf32>
    %292 = arith.addf %289, %291 : vector<8x128xf32>
    %293 = vector.broadcast %58 : f32 to vector<8x128xf32>
    %294 = arith.mulf %293, %129 : vector<8x128xf32>
    %295 = arith.addf %292, %294 : vector<8x128xf32>
    %296 = vector.broadcast %59 : f32 to vector<8x128xf32>
    %297 = arith.mulf %296, %138 : vector<8x128xf32>
    %298 = arith.addf %295, %297 : vector<8x128xf32>
    %cst_52 = arith.constant 0.000000e+00 : f32
    %299 = vector.broadcast %cst_52 : f32 to vector<8x128xf32>
    %300 = arith.maximumf %298, %299 : vector<8x128xf32>
    %301 = vector.broadcast %60 : f32 to vector<8x128xf32>
    %302 = arith.mulf %301, %102 : vector<8x128xf32>
    %303 = vector.broadcast %74 : f32 to vector<8x128xf32>
    %304 = arith.addf %303, %302 : vector<8x128xf32>
    %305 = vector.broadcast %61 : f32 to vector<8x128xf32>
    %306 = arith.mulf %305, %111 : vector<8x128xf32>
    %307 = arith.addf %304, %306 : vector<8x128xf32>
    %308 = vector.broadcast %62 : f32 to vector<8x128xf32>
    %309 = arith.mulf %308, %120 : vector<8x128xf32>
    %310 = arith.addf %307, %309 : vector<8x128xf32>
    %311 = vector.broadcast %63 : f32 to vector<8x128xf32>
    %312 = arith.mulf %311, %129 : vector<8x128xf32>
    %313 = arith.addf %310, %312 : vector<8x128xf32>
    %314 = vector.broadcast %64 : f32 to vector<8x128xf32>
    %315 = arith.mulf %314, %138 : vector<8x128xf32>
    %316 = arith.addf %313, %315 : vector<8x128xf32>
    %cst_53 = arith.constant 0.000000e+00 : f32
    %317 = vector.broadcast %cst_53 : f32 to vector<8x128xf32>
    %318 = arith.maximumf %316, %317 : vector<8x128xf32>
    %319 = vector.broadcast %75 : f32 to vector<8x128xf32>
    %320 = arith.mulf %319, %156 : vector<8x128xf32>
    %321 = vector.broadcast %85 : f32 to vector<8x128xf32>
    %322 = arith.addf %321, %320 : vector<8x128xf32>
    %323 = vector.broadcast %76 : f32 to vector<8x128xf32>
    %324 = arith.mulf %323, %174 : vector<8x128xf32>
    %325 = arith.addf %322, %324 : vector<8x128xf32>
    %326 = vector.broadcast %77 : f32 to vector<8x128xf32>
    %327 = arith.mulf %326, %192 : vector<8x128xf32>
    %328 = arith.addf %325, %327 : vector<8x128xf32>
    %329 = vector.broadcast %78 : f32 to vector<8x128xf32>
    %330 = arith.mulf %329, %210 : vector<8x128xf32>
    %331 = arith.addf %328, %330 : vector<8x128xf32>
    %332 = vector.broadcast %79 : f32 to vector<8x128xf32>
    %333 = arith.mulf %332, %228 : vector<8x128xf32>
    %334 = arith.addf %331, %333 : vector<8x128xf32>
    %335 = vector.broadcast %80 : f32 to vector<8x128xf32>
    %336 = arith.mulf %335, %246 : vector<8x128xf32>
    %337 = arith.addf %334, %336 : vector<8x128xf32>
    %338 = vector.broadcast %81 : f32 to vector<8x128xf32>
    %339 = arith.mulf %338, %264 : vector<8x128xf32>
    %340 = arith.addf %337, %339 : vector<8x128xf32>
    %341 = vector.broadcast %82 : f32 to vector<8x128xf32>
    %342 = arith.mulf %341, %282 : vector<8x128xf32>
    %343 = arith.addf %340, %342 : vector<8x128xf32>
    %344 = vector.broadcast %83 : f32 to vector<8x128xf32>
    %345 = arith.mulf %344, %300 : vector<8x128xf32>
    %346 = arith.addf %343, %345 : vector<8x128xf32>
    %347 = vector.broadcast %84 : f32 to vector<8x128xf32>
    %348 = arith.mulf %347, %318 : vector<8x128xf32>
    %349 = arith.addf %346, %348 : vector<8x128xf32>
    %350 = arith.index_cast %87 : i32 to index
    %c0_54 = arith.constant 0 : index
    %351 = vector.load %arg8[%350, %c0_54] : memref<8x128xf32, #tpu.memory_space<vmem>>, vector<8x128xf32>
    tpu.vector_store %arg8[%350, %c0_54], %349 {strides = array<i32>} : memref<8x128xf32, #tpu.memory_space<vmem>>, vector<8x128xf32>,
    %c1_i32 = arith.constant 1 : i32
    return
  }
  func.func @transform_0(%arg0: i32) -> (i32, i32, i32) {
    %c0_i32 = arith.constant 0 : i32
    %c0_i32_0 = arith.constant 0 : i32
    %c0_i32_1 = arith.constant 0 : i32
    return %c0_i32, %arg0, %c0_i32_0 : i32, i32, i32
  }
  func.func @transform_1(%arg0: i32) -> i32 {
    %c0_i32 = arith.constant 0 : i32
    %c0_i32_0 = arith.constant 0 : i32
    return %c0_i32 : i32
  }
  func.func @transform_2(%arg0: i32) -> i32 {
    %c0_i32 = arith.constant 0 : i32
    %c0_i32_0 = arith.constant 0 : i32
    return %c0_i32 : i32
  }
  func.func @transform_3(%arg0: i32) -> i32 {
    %c0_i32 = arith.constant 0 : i32
    %c0_i32_0 = arith.constant 0 : i32
    return %c0_i32 : i32
  }
  func.func @transform_4(%arg0: i32) -> i32 {
    %c0_i32 = arith.constant 0 : i32
    %c0_i32_0 = arith.constant 0 : i32
    return %c0_i32 : i32
  }
  func.func @transform_5(%arg0: i32) -> i32 {
    %c0_i32 = arith.constant 0 : i32
    %c0_i32_0 = arith.constant 0 : i32
    return %c0_i32 : i32
  }
  func.func @transform_6(%arg0: i32) -> i32 {
    %c0_i32 = arith.constant 0 : i32
    %c0_i32_0 = arith.constant 0 : i32
    return %c0_i32 : i32
  }
  func.func @transform_7(%arg0: i32) -> (i32, i32) {
    %c0_i32 = arith.constant 0 : i32
    %c0_i32_0 = arith.constant 0 : i32
    return %arg0, %c0_i32 : i32, i32
  }
}

</mosaic_0001>

<llo_original>
// kernel: tpu_custom_call.1
$region0: #{tpu_custom_call.1}
  #allocation0 [shape = 'u32[]', space=smem, size = 0x4, offset = 0x4, fixed_abs, tag = 'smem constant byte address 0x4 - core index']
  #allocation1 [shape = 'u32[144,128]{1,0:T(1,128)}', space=vmem, size = 0x12000, scoped, tag = 'internal scratch']
  #allocation2 [shape = 'f32[1]{0:T(128)S(6)}', space=smem, size = 0x200, scoped, tag = 'scoped memory for tpu_custom_call.1']
  %s0 = inlined_call_operand.hbm [shape: f32[2,8,128], index: 0, kind: input, shape index: {}]
  %s1 = inlined_call_operand.vmem [shape: f32[10], index: 1, kind: input, shape index: {}]
  %s2 = inlined_call_operand.vmem [shape: f32[5], index: 2, kind: input, shape index: {}]
  %s3 = inlined_call_operand.vmem [shape: f32[50], index: 3, kind: input, shape index: {}]
  %s4 = inlined_call_operand.vmem [shape: f32[10], index: 4, kind: input, shape index: {}]
  %s5 = inlined_call_operand.vmem [shape: f32[10], index: 5, kind: input, shape index: {}]
  %s6 = inlined_call_operand.<no memory space> [shape: f32[1], index: 6, kind: input, shape index: {}]
  %s7 = inlined_call_operand.hbm [shape: f32[8,128], index: 7, kind: output, shape index: {}]
  %s8 = sld [smem:[#allocation0]]
  $region62: #{tpu_custom_call.1} parent=0
    _
  %s10 = ssub.s32 1, %s8
  %s11 = scalar_select 0, %s10, %s8
  %12 = sst [smem:[#allocation2]] %s6
  $region1: #{tpu_custom_call.1} parent=0
    #allocation3 [shape = 'u8[8192]{0}', space=vmem, size = 0x2000, scoped, tag = 'input window, operand 0, single buffered']
    #allocation4 [shape = 's32[1]{0}', space=sflag, size = 0x4, scoped, tag = 'scoped memory for tpu_custom_call.1']
    #allocation5 [shape = 's32[1]{0}', space=sflag, size = 0x4, scoped, tag = 'scoped memory for tpu_custom_call.1']
    #allocation6 [shape = 's32[1]{0}', space=sflag, size = 0x4, scoped, tag = 'scoped memory for tpu_custom_call.1']
    #allocation7 [shape = 'u8[512]{0}', space=smem, size = 0x200, scoped, tag = 'input window, operand 1, single buffered']
    #allocation8 [shape = 'u8[512]{0}', space=smem, size = 0x200, scoped, tag = 'input window, operand 2, single buffered']
    #allocation9 [shape = 's32[1]{0}', space=sflag, size = 0x4, scoped, tag = 'scoped memory for tpu_custom_call.1']
    #allocation10 [shape = 'u8[512]{0}', space=smem, size = 0x200, scoped, tag = 'input window, operand 3, single buffered']
    #allocation11 [shape = 'u8[512]{0}', space=smem, size = 0x200, scoped, tag = 'input window, operand 4, single buffered']
    #allocation12 [shape = 's32[1]{0}', space=sflag, size = 0x4, scoped, tag = 'scoped memory for tpu_custom_call.1']
    #allocation13 [shape = 'u8[512]{0}', space=smem, size = 0x200, scoped, tag = 'input window, operand 5, single buffered']
    #allocation14 [shape = 'u8[4096]{0}', space=vmem, size = 0x1000, scoped, tag = 'output window, operand 0, single buffered']
    %13 = vsyncpa [#allocation4], 0
    %14 = vsyncpa [#allocation6], 0
    %15 = vsyncpa [#allocation9], 0
    %16 = vsyncpa [#allocation12], 0
    %17 = vsyncpa [#allocation5], 0
    // Predicated region
    $region2: #{tpu_custom_call.1} parent=1 // pred_check
      _
    $region3: #{tpu_custom_call.1} parent=1 // pred_check_branch
      %19 = sbr.rel (0) target = $region5
    $region4: #{tpu_custom_call.1} parent=1 // pred_region
      %s21 = ssub.s32 256, 256
      %22 = vsyncadd [#allocation4], %s21
      %s23 = sshll.u32 [#allocation3], 4
      %s24 = int_to_ptr.vmem [resolvable:$true] %s23
      %29 = dma.hbm_to_vmem [thread:$0]  %s0, 256, %s24, [#allocation4], 128, 128, 8
    $region5: #{tpu_custom_call.1} parent=1 // pred_fallthru
      _
    // Predicated region
    $region6: #{tpu_custom_call.1} parent=1 // pred_check
      _
    $region7: #{tpu_custom_call.1} parent=1 // pred_check_branch
      %31 = sbr.rel (0) target = $region9
    $region8: #{tpu_custom_call.1} parent=1 // pred_region
      %s33 = ssub.s32 16, 16
      %34 = vsyncadd [#allocation6], %s33
      %s36 = sshll.u32 %s1, 4
      %s37 = int_to_ptr.vmem [resolvable:$true] %s36
      %39 = dma.vmem_to_smem %s37, 16, [#allocation7], [#allocation6]
    $region9: #{tpu_custom_call.1} parent=1 // pred_fallthru
      _
    // Predicated region
    $region10: #{tpu_custom_call.1} parent=1 // pred_check
      _
    $region11: #{tpu_custom_call.1} parent=1 // pred_check_branch
      %41 = sbr.rel (0) target = $region13
    $region12: #{tpu_custom_call.1} parent=1 // pred_region
      %s43 = ssub.s32 16, 16
      %44 = vsyncadd [#allocation9], %s43
      %s46 = sshll.u32 %s2, 4
      %s47 = int_to_ptr.vmem [resolvable:$true] %s46
      %49 = dma.vmem_to_smem %s47, 16, [#allocation8], [#allocation9]
    $region13: #{tpu_custom_call.1} parent=1 // pred_fallthru
      _
    // Predicated region
    $region14: #{tpu_custom_call.1} parent=1 // pred_check
      _
    $region15: #{tpu_custom_call.1} parent=1 // pred_check_branch
      %51 = sbr.rel (0) target = $region17
    $region16: #{tpu_custom_call.1} parent=1 // pred_region
      %s53 = ssub.s32 16, 16
      %54 = vsyncadd [#allocation9], %s53
      %s56 = sshll.u32 %s3, 4
      %s57 = int_to_ptr.vmem [resolvable:$true] %s56
      %59 = dma.vmem_to_smem %s57, 16, [#allocation10], [#allocation9]
    $region17: #{tpu_custom_call.1} parent=1 // pred_fallthru
      _
    // Predicated region
    $region18: #{tpu_custom_call.1} parent=1 // pred_check
      _
    $region19: #{tpu_custom_call.1} parent=1 // pred_check_branch
      %61 = sbr.rel (0) target = $region21
    $region20: #{tpu_custom_call.1} parent=1 // pred_region
      %s63 = ssub.s32 16, 16
      %64 = vsyncadd [#allocation12], %s63
      %s66 = sshll.u32 %s4, 4
      %s67 = int_to_ptr.vmem [resolvable:$true] %s66
      %69 = dma.vmem_to_smem %s67, 16, [#allocation11], [#allocation12]
    $region21: #{tpu_custom_call.1} parent=1 // pred_fallthru
      _
    // Predicated region
    $region22: #{tpu_custom_call.1} parent=1 // pred_check
      _
    $region23: #{tpu_custom_call.1} parent=1 // pred_check_branch
      %71 = sbr.rel (0) target = $region25
    $region24: #{tpu_custom_call.1} parent=1 // pred_region
      %s73 = ssub.s32 16, 16
      %74 = vsyncadd [#allocation12], %s73
      %s76 = sshll.u32 %s5, 4
      %s77 = int_to_ptr.vmem [resolvable:$true] %s76
      %79 = dma.vmem_to_smem %s77, 16, [#allocation13], [#allocation12]
    $region25: #{tpu_custom_call.1} parent=1 // pred_fallthru
      _
    // Predicated region
    $region26: #{tpu_custom_call.1} parent=1 // pred_check
      _
    $region27: #{tpu_custom_call.1} parent=1 // pred_check_branch
      %81 = sbr.rel (0) target = $region29
    $region28: #{tpu_custom_call.1} parent=1 // pred_region
      _
    $region29: #{tpu_custom_call.1} parent=1 // pred_fallthru
      _
    // Predicated region
    $region30: #{tpu_custom_call.1} parent=1 // pred_check
      _
    $region31: #{tpu_custom_call.1} parent=1 // pred_check_branch
      %83 = sbr.rel (0) target = $region33
    $region32: #{tpu_custom_call.1} parent=1 // pred_region
      %84 = dma.done [#allocation4], 256
    $region33: #{tpu_custom_call.1} parent=1 // pred_fallthru
      _
    // Predicated region
    $region34: #{tpu_custom_call.1} parent=1 // pred_check
      _
    $region35: #{tpu_custom_call.1} parent=1 // pred_check_branch
      %86 = sbr.rel (0) target = $region37
    $region36: #{tpu_custom_call.1} parent=1 // pred_region
      %87 = dma.done [#allocation6], 16
    $region37: #{tpu_custom_call.1} parent=1 // pred_fallthru
      _
    // Predicated region
    $region38: #{tpu_custom_call.1} parent=1 // pred_check
      _
    $region39: #{tpu_custom_call.1} parent=1 // pred_check_branch
      %89 = sbr.rel (0) target = $region41
    $region40: #{tpu_custom_call.1} parent=1 // pred_region
      %90 = dma.done [#allocation9], 16
    $region41: #{tpu_custom_call.1} parent=1 // pred_fallthru
      _
    // Predicated region
    $region42: #{tpu_custom_call.1} parent=1 // pred_check
      _
    $region43: #{tpu_custom_call.1} parent=1 // pred_check_branch
      %92 = sbr.rel (0) target = $region45
    $region44: #{tpu_custom_call.1} parent=1 // pred_region
      %93 = dma.done [#allocation9], 16
    $region45: #{tpu_custom_call.1} parent=1 // pred_fallthru
      _
    // Predicated region
    $region46: #{tpu_custom_call.1} parent=1 // pred_check
      _
    $region47: #{tpu_custom_call.1} parent=1 // pred_check_branch
      %95 = sbr.rel (0) target = $region49
    $region48: #{tpu_custom_call.1} parent=1 // pred_region
      %96 = dma.done [#allocation12], 16
    $region49: #{tpu_custom_call.1} parent=1 // pred_fallthru
      _
    // Predicated region
    $region50: #{tpu_custom_call.1} parent=1 // pred_check
      _
    $region51: #{tpu_custom_call.1} parent=1 // pred_check_branch
      %98 = sbr.rel (0) target = $region53
    $region52: #{tpu_custom_call.1} parent=1 // pred_region
      %99 = dma.done [#allocation12], 16
    $region53: #{tpu_custom_call.1} parent=1 // pred_fallthru
      _
    %100 = sfence
    %s101 = sld [smem:[#allocation7]]
    %s102 = sld [smem:[#allocation7 + $0x1]]
    %s103 = sld [smem:[#allocation7 + $0x2]]
    %s104 = sld [smem:[#allocation7 + $0x3]]
    %s105 = sld [smem:[#allocation7 + $0x4]]
    %s106 = sld [smem:[#allocation7 + $0x5]]
    %s107 = sld [smem:[#allocation7 + $0x6]]
    %s108 = sld [smem:[#allocation7 + $0x7]]
    %s109 = sld [smem:[#allocation7 + $0x8]]
    %s110 = sld [smem:[#allocation7 + $0x9]]
    %s111 = sld [smem:[#allocation8]]
    %s112 = sld [smem:[#allocation8 + $0x1]]
    %s113 = sld [smem:[#allocation8 + $0x2]]
    %s114 = sld [smem:[#allocation8 + $0x3]]
    %s115 = sld [smem:[#allocation8 + $0x4]]
    %s116 = sld [smem:[#allocation10]]
    %s117 = sld [smem:[#allocation10 + $0x1]]
    %s118 = sld [smem:[#allocation10 + $0x2]]
    %s119 = sld [smem:[#allocation10 + $0x3]]
    %s120 = sld [smem:[#allocation10 + $0x4]]
    %s121 = sld [smem:[#allocation10 + $0x5]]
    %s122 = sld [smem:[#allocation10 + $0x6]]
    %s123 = sld [smem:[#allocation10 + $0x7]]
    %s124 = sld [smem:[#allocation10 + $0x8]]
    %s125 = sld [smem:[#allocation10 + $0x9]]
    %s126 = sld [smem:[#allocation10 + $0xa]]
    %s127 = sld [smem:[#allocation10 + $0xb]]
    %s128 = sld [smem:[#allocation10 + $0xc]]
    %s129 = sld [smem:[#allocation10 + $0xd]]
    %s130 = sld [smem:[#allocation10 + $0xe]]
    %s131 = sld [smem:[#allocation10 + $0xf]]
    %s132 = sld [smem:[#allocation10 + $0x10]]
    %s133 = sld [smem:[#allocation10 + $0x11]]
    %s134 = sld [smem:[#allocation10 + $0x12]]
    %s135 = sld [smem:[#allocation10 + $0x13]]
    %s136 = sld [smem:[#allocation10 + $0x14]]
    %s137 = sld [smem:[#allocation10 + $0x15]]
    %s138 = sld [smem:[#allocation10 + $0x16]]
    %s139 = sld [smem:[#allocation10 + $0x17]]
    %s140 = sld [smem:[#allocation10 + $0x18]]
    %s141 = sld [smem:[#allocation10 + $0x19]]
    %s142 = sld [smem:[#allocation10 + $0x1a]]
    %s143 = sld [smem:[#allocation10 + $0x1b]]
    %s144 = sld [smem:[#allocation10 + $0x1c]]
    %s145 = sld [smem:[#allocation10 + $0x1d]]
    %s146 = sld [smem:[#allocation10 + $0x1e]]
    %s147 = sld [smem:[#allocation10 + $0x1f]]
    %s148 = sld [smem:[#allocation10 + $0x20]]
    %s149 = sld [smem:[#allocation10 + $0x21]]
    %s150 = sld [smem:[#allocation10 + $0x22]]
    %s151 = sld [smem:[#allocation10 + $0x23]]
    %s152 = sld [smem:[#allocation10 + $0x24]]
    %s153 = sld [smem:[#allocation10 + $0x25]]
    %s154 = sld [smem:[#allocation10 + $0x26]]
    %s155 = sld [smem:[#allocation10 + $0x27]]
    %s156 = sld [smem:[#allocation10 + $0x28]]
    %s157 = sld [smem:[#allocation10 + $0x29]]
    %s158 = sld [smem:[#allocation10 + $0x2a]]
    %s159 = sld [smem:[#allocation10 + $0x2b]]
    %s160 = sld [smem:[#allocation10 + $0x2c]]
    %s161 = sld [smem:[#allocation10 + $0x2d]]
    %s162 = sld [smem:[#allocation10 + $0x2e]]
    %s163 = sld [smem:[#allocation10 + $0x2f]]
    %s164 = sld [smem:[#allocation10 + $0x30]]
    %s165 = sld [smem:[#allocation10 + $0x31]]
    %s166 = sld [smem:[#allocation11]]
    %s167 = sld [smem:[#allocation11 + $0x1]]
    %s168 = sld [smem:[#allocation11 + $0x2]]
    %s169 = sld [smem:[#allocation11 + $0x3]]
    %s170 = sld [smem:[#allocation11 + $0x4]]
    %s171 = sld [smem:[#allocation11 + $0x5]]
    %s172 = sld [smem:[#allocation11 + $0x6]]
    %s173 = sld [smem:[#allocation11 + $0x7]]
    %s174 = sld [smem:[#allocation11 + $0x8]]
    %s175 = sld [smem:[#allocation11 + $0x9]]
    %s176 = sld [smem:[#allocation13]]
    %s177 = sld [smem:[#allocation13 + $0x1]]
    %s178 = sld [smem:[#allocation13 + $0x2]]
    %s179 = sld [smem:[#allocation13 + $0x3]]
    %s180 = sld [smem:[#allocation13 + $0x4]]
    %s181 = sld [smem:[#allocation13 + $0x5]]
    %s182 = sld [smem:[#allocation13 + $0x6]]
    %s183 = sld [smem:[#allocation13 + $0x7]]
    %s184 = sld [smem:[#allocation13 + $0x8]]
    %s185 = sld [smem:[#allocation13 + $0x9]]
    %s186 = sld [smem:[#allocation2]]
    %v187 = vld [vmem:[#allocation3] sm:$0xff]
    %s188 = sadd.s32 0, 8
    %s189 = scalar_lea.vmem [#allocation3], %s188
    %v190 = vld [vmem:[%s189] sm:$0xff]
    %v191 = vstv %s101
    %v192 = vmul.f32 %v191, %v187
    %v193 = vstv %s111
    %v194 = vadd.f32 %v193, %v192
    %v195 = vstv %s102
    %v196 = vmul.f32 %v195, %v190
    %v197 = vadd.f32 %v194, %v196
    %v198 = vmax.f32 %v197, 0.0
    %v199 = vstv %s103
    %v200 = vmul.f32 %v199, %v187
    %v201 = vstv %s112
    %v202 = vadd.f32 %v201, %v200
    %v203 = vstv %s104
    %v204 = vmul.f32 %v203, %v190
    %v205 = vadd.f32 %v202, %v204
    %v206 = vmax.f32 %v205, 0.0
    %v207 = vstv %s105
    %v208 = vmul.f32 %v207, %v187
    %v209 = vstv %s113
    %v210 = vadd.f32 %v209, %v208
    %v211 = vstv %s106
    %v212 = vmul.f32 %v211, %v190
    %v213 = vadd.f32 %v210, %v212
    %v214 = vmax.f32 %v213, 0.0
    %v215 = vstv %s107
    %v216 = vmul.f32 %v215, %v187
    %v217 = vstv %s114
    %v218 = vadd.f32 %v217, %v216
    %v219 = vstv %s108
    %v220 = vmul.f32 %v219, %v190
    %v221 = vadd.f32 %v218, %v220
    %v222 = vmax.f32 %v221, 0.0
    %v223 = vstv %s109
    %v224 = vmul.f32 %v223, %v187
    %v225 = vstv %s115
    %v226 = vadd.f32 %v225, %v224
    %v227 = vstv %s110
    %v228 = vmul.f32 %v227, %v190
    %v229 = vadd.f32 %v226, %v228
    %v230 = vmax.f32 %v229, 0.0
    %v231 = vstv %s116
    %v232 = vmul.f32 %v231, %v198
    %v233 = vstv %s166
    %v234 = vadd.f32 %v233, %v232
    %v235 = vstv %s117
    %v236 = vmul.f32 %v235, %v206
    %v237 = vadd.f32 %v234, %v236
    %v238 = vstv %s118
    %v239 = vmul.f32 %v238, %v214
    %v240 = vadd.f32 %v237, %v239
    %v241 = vstv %s119
    %v242 = vmul.f32 %v241, %v222
    %v243 = vadd.f32 %v240, %v242
    %v244 = vstv %s120
    %v245 = vmul.f32 %v244, %v230
    %v246 = vadd.f32 %v243, %v245
    %v247 = vmax.f32 %v246, 0.0
    %v248 = vstv %s121
    %v249 = vmul.f32 %v248, %v198
    %v250 = vstv %s167
    %v251 = vadd.f32 %v250, %v249
    %v252 = vstv %s122
    %v253 = vmul.f32 %v252, %v206
    %v254 = vadd.f32 %v251, %v253
    %v255 = vstv %s123
    %v256 = vmul.f32 %v255, %v214
    %v257 = vadd.f32 %v254, %v256
    %v258 = vstv %s124
    %v259 = vmul.f32 %v258, %v222
    %v260 = vadd.f32 %v257, %v259
    %v261 = vstv %s125
    %v262 = vmul.f32 %v261, %v230
    %v263 = vadd.f32 %v260, %v262
    %v264 = vmax.f32 %v263, 0.0
    %v265 = vstv %s126
    %v266 = vmul.f32 %v265, %v198
    %v267 = vstv %s168
    %v268 = vadd.f32 %v267, %v266
    %v269 = vstv %s127
    %v270 = vmul.f32 %v269, %v206
    %v271 = vadd.f32 %v268, %v270
    %v272 = vstv %s128
    %v273 = vmul.f32 %v272, %v214
    %v274 = vadd.f32 %v271, %v273
    %v275 = vstv %s129
    %v276 = vmul.f32 %v275, %v222
    %v277 = vadd.f32 %v274, %v276
    %v278 = vstv %s130
    %v279 = vmul.f32 %v278, %v230
    %v280 = vadd.f32 %v277, %v279
    %v281 = vmax.f32 %v280, 0.0
    %v282 = vstv %s131
    %v283 = vmul.f32 %v282, %v198
    %v284 = vstv %s169
    %v285 = vadd.f32 %v284, %v283
    %v286 = vstv %s132
    %v287 = vmul.f32 %v286, %v206
    %v288 = vadd.f32 %v285, %v287
    %v289 = vstv %s133
    %v290 = vmul.f32 %v289, %v214
    %v291 = vadd.f32 %v288, %v290
    %v292 = vstv %s134
    %v293 = vmul.f32 %v292, %v222
    %v294 = vadd.f32 %v291, %v293
    %v295 = vstv %s135
    %v296 = vmul.f32 %v295, %v230
    %v297 = vadd.f32 %v294, %v296
    %v298 = vmax.f32 %v297, 0.0
    %v299 = vstv %s136
    %v300 = vmul.f32 %v299, %v198
    %v301 = vstv %s170
    %v302 = vadd.f32 %v301, %v300
    %v303 = vstv %s137
    %v304 = vmul.f32 %v303, %v206
    %v305 = vadd.f32 %v302, %v304
    %v306 = vstv %s138
    %v307 = vmul.f32 %v306, %v214
    %v308 = vadd.f32 %v305, %v307
    %v309 = vstv %s139
    %v310 = vmul.f32 %v309, %v222
    %v311 = vadd.f32 %v308, %v310
    %v312 = vstv %s140
    %v313 = vmul.f32 %v312, %v230
    %v314 = vadd.f32 %v311, %v313
    %v315 = vmax.f32 %v314, 0.0
    %v316 = vstv %s141
    %v317 = vmul.f32 %v316, %v198
    %v318 = vstv %s171
    %v319 = vadd.f32 %v318, %v317
    %v320 = vstv %s142
    %v321 = vmul.f32 %v320, %v206
    %v322 = vadd.f32 %v319, %v321
    %v323 = vstv %s143
    %v324 = vmul.f32 %v323, %v214
    %v325 = vadd.f32 %v322, %v324
    %v326 = vstv %s144
    %v327 = vmul.f32 %v326, %v222
    %v328 = vadd.f32 %v325, %v327
    %v329 = vstv %s145
    %v330 = vmul.f32 %v329, %v230
    %v331 = vadd.f32 %v328, %v330
    %v332 = vmax.f32 %v331, 0.0
    %v333 = vstv %s146
    %v334 = vmul.f32 %v333, %v198
    %v335 = vstv %s172
    %v336 = vadd.f32 %v335, %v334
    %v337 = vstv %s147
    %v338 = vmul.f32 %v337, %v206
    %v339 = vadd.f32 %v336, %v338
    %v340 = vstv %s148
    %v341 = vmul.f32 %v340, %v214
    %v342 = vadd.f32 %v339, %v341
    %v343 = vstv %s149
    %v344 = vmul.f32 %v343, %v222
    %v345 = vadd.f32 %v342, %v344
    %v346 = vstv %s150
    %v347 = vmul.f32 %v346, %v230
    %v348 = vadd.f32 %v345, %v347
    %v349 = vmax.f32 %v348, 0.0
    %v350 = vstv %s151
    %v351 = vmul.f32 %v350, %v198
    %v352 = vstv %s173
    %v353 = vadd.f32 %v352, %v351
    %v354 = vstv %s152
    %v355 = vmul.f32 %v354, %v206
    %v356 = vadd.f32 %v353, %v355
    %v357 = vstv %s153
    %v358 = vmul.f32 %v357, %v214
    %v359 = vadd.f32 %v356, %v358
    %v360 = vstv %s154
    %v361 = vmul.f32 %v360, %v222
    %v362 = vadd.f32 %v359, %v361
    %v363 = vstv %s155
    %v364 = vmul.f32 %v363, %v230
    %v365 = vadd.f32 %v362, %v364
    %v366 = vmax.f32 %v365, 0.0
    %v367 = vstv %s156
    %v368 = vmul.f32 %v367, %v198
    %v369 = vstv %s174
    %v370 = vadd.f32 %v369, %v368
    %v371 = vstv %s157
    %v372 = vmul.f32 %v371, %v206
    %v373 = vadd.f32 %v370, %v372
    %v374 = vstv %s158
    %v375 = vmul.f32 %v374, %v214
    %v376 = vadd.f32 %v373, %v375
    %v377 = vstv %s159
    %v378 = vmul.f32 %v377, %v222
    %v379 = vadd.f32 %v376, %v378
    %v380 = vstv %s160
    %v381 = vmul.f32 %v380, %v230
    %v382 = vadd.f32 %v379, %v381
    %v383 = vmax.f32 %v382, 0.0
    %v384 = vstv %s161
    %v385 = vmul.f32 %v384, %v198
    %v386 = vstv %s175
    %v387 = vadd.f32 %v386, %v385
    %v388 = vstv %s162
    %v389 = vmul.f32 %v388, %v206
    %v390 = vadd.f32 %v387, %v389
    %v391 = vstv %s163
    %v392 = vmul.f32 %v391, %v214
    %v393 = vadd.f32 %v390, %v392
    %v394 = vstv %s164
    %v395 = vmul.f32 %v394, %v222
    %v396 = vadd.f32 %v393, %v395
    %v397 = vstv %s165
    %v398 = vmul.f32 %v397, %v230
    %v399 = vadd.f32 %v396, %v398
    %v400 = vmax.f32 %v399, 0.0
    %v401 = vstv %s176
    %v402 = vmul.f32 %v401, %v247
    %v403 = vstv %s186
    %v404 = vadd.f32 %v403, %v402
    %v405 = vstv %s177
    %v406 = vmul.f32 %v405, %v264
    %v407 = vadd.f32 %v404, %v406
    %v408 = vstv %s178
    %v409 = vmul.f32 %v408, %v281
    %v410 = vadd.f32 %v407, %v409
    %v411 = vstv %s179
    %v412 = vmul.f32 %v411, %v298
    %v413 = vadd.f32 %v410, %v412
    %v414 = vstv %s180
    %v415 = vmul.f32 %v414, %v315
    %v416 = vadd.f32 %v413, %v415
    %v417 = vstv %s181
    %v418 = vmul.f32 %v417, %v332
    %v419 = vadd.f32 %v416, %v418
    %v420 = vstv %s182
    %v421 = vmul.f32 %v420, %v349
    %v422 = vadd.f32 %v419, %v421
    %v423 = vstv %s183
    %v424 = vmul.f32 %v423, %v366
    %v425 = vadd.f32 %v422, %v424
    %v426 = vstv %s184
    %v427 = vmul.f32 %v426, %v383
    %v428 = vadd.f32 %v425, %v427
    %v429 = vstv %s185
    %v430 = vmul.f32 %v429, %v400
    %v431 = vadd.f32 %v428, %v430
    %432 = vst [vmem:[#allocation14] sm:$0xff] %v431
    // Predicated region
    $region54: #{tpu_custom_call.1} parent=1 // pred_check
      _
    $region55: #{tpu_custom_call.1} parent=1 // pred_check_branch
      %434 = sbr.rel (0) target = $region57
    $region56: #{tpu_custom_call.1} parent=1 // pred_region
      %s436 = ssub.s32 128, 128
      %437 = vsyncadd [#allocation5], %s436
      %s439 = sshll.u32 [#allocation14], 4
      %s440 = int_to_ptr.vmem [resolvable:$true] %s439
      %442 = dma.vmem_to_hbm [thread:$0]  %s440, 128, %s7, [#allocation5]
    $region57: #{tpu_custom_call.1} parent=1 // pred_fallthru
      _
    // Predicated region
    $region58: #{tpu_custom_call.1} parent=1 // pred_check
      _
    $region59: #{tpu_custom_call.1} parent=1 // pred_check_branch
      %444 = sbr.rel (0) target = $region61
    $region60: #{tpu_custom_call.1} parent=1 // pred_region
      %445 = dma.done [#allocation5], 128
    $region61: #{tpu_custom_call.1} parent=1 // pred_fallthru
      _
    %446 = vsyncpa [#allocation4], 1
    %447 = vsyncpa [#allocation5], 1
    %448 = vsyncpa [#allocation6], 1
    %449 = vsyncpa [#allocation9], 1
    %450 = vsyncpa [#allocation12], 1

</llo_original>
